<compile_context>
chip_gen: v6e
topology: v6e:2x2x1
jax: 0.10.0
libtpu: 0.0.40
codegen_flags: <defaults>
</compile_context>

<pallas_src>
import jax
import jax.numpy as jnp
from jax import lax
from jax.experimental import pallas as pl
from jax.experimental.pallas import tpu as pltpu


def _refinement_kernel(x_ref, b0_ref, b1_ref, bias1_ref, b2_ref, out_ref,
                       xpad_ref, hpad_ref):
    """One image per grid step; all 2-D operands are (rows, fused W*C lanes)."""
    f32, bf16 = jnp.float32, jnp.bfloat16
    H, wcin = x_ref.shape
    wc = out_ref.shape[1]

    xf = x_ref[...]                                   # (H, W*Cin) f32
    xb = xf.astype(bf16)

    # ---- residual path: 1x1 conv == block-diagonal lane-fused matmul ----
    u = jnp.dot(xb, b0_ref[...], preferred_element_type=f32)          # (H, W*C)

    # ---- stage x with a 1-row zero halo (only the 2 halo rows get zeroed) ----
    xpad_ref[0:1, :] = jnp.zeros((1, wcin), f32)
    xpad_ref[H + 1:H + 2, :] = jnp.zeros((1, wcin), f32)
    xpad_ref[1:H + 1, :] = xf

    # ---- conv3x3 #1 (1x1 conv + BN scale pre-folded into banded weights) ----
    # one lane-dense bf16 matmul per row tap, f32 accumulation on the MXU
    acc1 = jnp.dot(xpad_ref[0:H, :].astype(bf16), b1_ref[0],
                   preferred_element_type=f32)                         # rows i-1
    acc1 = acc1 + jnp.dot(xb, b1_ref[1], preferred_element_type=f32)   # rows i
    acc1 = acc1 + jnp.dot(xpad_ref[2:H + 2, :].astype(bf16), b1_ref[2],
                          preferred_element_type=f32)                  # rows i+1
    h1 = jnp.maximum(acc1 + bias1_ref[...], 0.0)                       # BN bias + ReLU

    # ---- stage h1 with a 1-row zero halo ----
    hpad_ref[0:1, :] = jnp.zeros((1, wc), f32)
    hpad_ref[H + 1:H + 2, :] = jnp.zeros((1, wc), f32)
    hpad_ref[1:H + 1, :] = h1

    # ---- conv3x3 #2 ----
    acc2 = jnp.dot(hpad_ref[0:H, :].astype(bf16), b2_ref[0],
                   preferred_element_type=f32)
    acc2 = acc2 + jnp.dot(h1.astype(bf16), b2_ref[1],
                          preferred_element_type=f32)
    acc2 = acc2 + jnp.dot(hpad_ref[2:H + 2, :].astype(bf16), b2_ref[2],
                          preferred_element_type=f32)

    # ---- residual add + final ReLU; lane-dense (W*C) store ----
    out_ref[...] = jnp.maximum(u + acc2, 0.0).astype(out_ref.dtype)


def _banded_conv_weights(w_hwio, w_spatial):
    """3x3 conv weights (3,3,Ci,Co) -> per-row-tap banded matrices.

    Returns (3, W*Ci, W*Co) where B[kh][j_in*Ci+ci, j_out*Co+co] equals
    w[kh, j_in-j_out+1, ci, co] when |j_in-j_out| <= 1, else 0, so that
    sum_kh (row-shifted (H, W*Ci) slab) @ B[kh] is the zero-padded 3x3 conv
    in the lane-fused layout (out-of-range kw columns drop out automatically).
    """
    _, _, ci, co = w_hwio.shape
    j_in = jnp.arange(w_spatial)[:, None]
    j_out = jnp.arange(w_spatial)[None, :]
    kw = j_in - j_out + 1
    valid = (kw >= 0) & (kw <= 2)
    kw = jnp.clip(kw, 0, 2)
    mats = []
    for kh in range(3):
        blocks = jnp.where(valid[:, :, None, None], w_hwio[kh][kw], 0.0)
        mats.append(jnp.transpose(blocks, (0, 2, 1, 3)).reshape(
            w_spatial * ci, w_spatial * co))
    return jnp.stack(mats)


@jax.jit
def refinement_block_forward(x_nchw, params):
    """Forward pass of RefinementBlock (BatchNorm in eval mode, eps=1e-5)."""
    N, Cin, H, W = x_nchw.shape
    w0 = params["conv1x1_w"]          # (C, Cin, 1, 1)  PyTorch layout
    w1 = params["conv3x3_1_w"]        # (C, C, 3, 3)
    w2 = params["conv3x3_2_w"]        # (C, C, 3, 3)
    C = w0.shape[0]
    eps = 1e-5

    # ---- fold BN (eval) and the 1x1 conv into the first 3x3 conv weights ----
    w0_mat = w0[:, :, 0, 0].T                                   # (Cin, C)
    w1_hwio = jnp.transpose(w1, (2, 3, 1, 0))                   # (3,3,C,C)
    w2_hwio = jnp.transpose(w2, (2, 3, 1, 0))                   # (3,3,C,C)
    scale = params["bn_gamma"] / jnp.sqrt(params["bn_var"] + eps)
    bias = params["bn_beta"] - params["bn_mean"] * scale
    w1_eff = jnp.einsum("xc,hwcd->hwxd", w0_mat, w1_hwio) * scale   # (3,3,Cin,C)

    # ---- lane-fused (banded / block-diagonal) weights, cast to bf16 ----
    b1 = _banded_conv_weights(w1_eff, W).astype(jnp.bfloat16)   # (3, W*Cin, W*C)
    b2 = _banded_conv_weights(w2_hwio, W).astype(jnp.bfloat16)  # (3, W*C,  W*C)
    eye = jnp.eye(W, dtype=w0_mat.dtype)
    b0 = (eye[:, None, :, None] * w0_mat[None, :, None, :]
          ).reshape(W * Cin, W * C).astype(jnp.bfloat16)        # (W*Cin, W*C)
    bias_fused = jnp.tile(bias, W)[None, :]                     # (1, W*C) f32

    # NCHW -> lane-fused (N, H, W*Cin)
    x_fused = jnp.transpose(x_nchw, (0, 2, 3, 1)).reshape(N, H, W * Cin)

    out_fused = pl.pallas_call(
        _refinement_kernel,
        out_shape=jax.ShapeDtypeStruct((N, H, W * C), x_nchw.dtype),
        grid=(N,),
        in_specs=[
            pl.BlockSpec((None, H, W * Cin), lambda n: (n, 0, 0)),   # x (per image)
            pl.BlockSpec((W * Cin, W * C), lambda n: (0, 0)),        # b0
            pl.BlockSpec((3, W * Cin, W * C), lambda n: (0, 0, 0)),  # b1
            pl.BlockSpec((1, W * C), lambda n: (0, 0)),              # BN bias
            pl.BlockSpec((3, W * C, W * C), lambda n: (0, 0, 0)),    # b2
        ],
        out_specs=pl.BlockSpec((None, H, W * C), lambda n: (n, 0, 0)),
        scratch_shapes=[
            pltpu.VMEM((H + 2, W * Cin), jnp.float32),   # x with 1-row halo
            pltpu.VMEM((H + 2, W * C), jnp.float32),     # h1 with 1-row halo
        ],
        compiler_params=pltpu.CompilerParams(
            dimension_semantics=("parallel",),           # batch across cores (v7x)
            vmem_limit_bytes=32 * 1024 * 1024,
        ),
    )(x_fused, b0, b1, bias_fused, b2)

    # lane-fused (N, H, W*C) -> NCHW
    return jnp.transpose(out_fused.reshape(N, H, W, C), (0, 3, 1, 2))


# ---------------- pure-JAX reference (for correctness check) ----------------
def refinement_block_reference(x_nchw, params, eps=1e-5):
    def conv(x, w, pad):
        return lax.conv_general_dilated(
            x, w, window_strides=(1, 1), padding=pad,
            dimension_numbers=("NCHW", "OIHW", "NCHW"))
    u = conv(x_nchw, params["conv1x1_w"], ((0, 0), (0, 0)))
    h = conv(u, params["conv3x3_1_w"], ((1, 1), (1, 1)))
    scale = params["bn_gamma"] / jnp.sqrt(params["bn_var"] + eps)
    bias = params["bn_beta"] - params["bn_mean"] * scale
    h = jnp.maximum(h * scale[None, :, None, None] + bias[None, :, None, None], 0.0)
    h = conv(h, params["conv3x3_2_w"], ((1, 1), (1, 1)))
    return jnp.maximum(u + h, 0.0)


if __name__ == "__main__":
    N, Cin, C, H, W = 2, 4, 8, 16, 16      # in_channels=4, channels=8
    key = jax.random.PRNGKey(0)
    ks = jax.random.split(key, 8)

    x = jax.random.normal(ks[0], (N, Cin, H, W), jnp.float32)
    params = {
        "conv1x1_w": 0.3 * jax.random.normal(ks[1], (C, Cin, 1, 1), jnp.float32),
        "conv3x3_1_w": 0.2 * jax.random.normal(ks[2], (C, C, 3, 3), jnp.float32),
        "conv3x3_2_w": 0.2 * jax.random.normal(ks[3], (C, C, 3, 3), jnp.float32),
        "bn_gamma": 1.0 + 0.1 * jax.random.normal(ks[4], (C,), jnp.float32),
        "bn_beta": 0.1 * jax.random.normal(ks[5], (C,), jnp.float32),
        "bn_mean": 0.1 * jax.random.normal(ks[6], (C,), jnp.float32),
        "bn_var": 1.0 + 0.1 * jax.random.uniform(ks[7], (C,), jnp.float32),
    }

    out = jax.block_until_ready(refinement_block_forward(x, params))
    ref = jax.block_until_ready(refinement_block_reference(x, params))

    assert out.shape == (N, C, H, W), out.shape
    # bf16 MXU operands with f32 accumulation -> ~1e-2-level agreement with
    # the pure-f32 reference; structural errors would be O(1).
    assert jnp.allclose(out, ref, rtol=3e-2, atol=3e-2), \
        float(jnp.max(jnp.abs(out - ref)))
    print("KERNEL_OK")
</pallas_src>

<mosaic_0001>
module attributes {stable_mosaic.version = 11 : i64} {
  func.func @_refinement_kernel(%arg0: i32, %arg1: memref<1x16x64xf32, #tpu.memory_space<vmem>>, %arg2: memref<64x128xbf16, #tpu.memory_space<vmem>>, %arg3: memref<3x64x128xbf16, #tpu.memory_space<vmem>>, %arg4: memref<1x128xf32, #tpu.memory_space<vmem>>, %arg5: memref<3x128x128xbf16, #tpu.memory_space<vmem>>, %arg6: memref<1x16x128xf32, #tpu.memory_space<vmem>>, %arg7: memref<18x64xf32, #tpu.memory_space<vmem>>, %arg8: memref<18x128xf32, #tpu.memory_space<vmem>>) attributes {dimension_semantics = [#tpu.dimension_semantics<parallel>], iteration_bounds = array<i64: 2>, scalar_prefetch = 0 : i64, scratch_operands = 2 : i64, tpu.core_type = #tpu.core_type<tc>, window_params = [{transform_indices = @transform_0, window_bounds = array<i64: 1, 16, 64>}, {pipeline_mode = #tpu.pipeline_mode<synchronous>, transform_indices = @transform_1, window_bounds = array<i64: 64, 128>}, {pipeline_mode = #tpu.pipeline_mode<synchronous>, transform_indices = @transform_2, window_bounds = array<i64: 3, 64, 128>}, {pipeline_mode = #tpu.pipeline_mode<synchronous>, transform_indices = @transform_3, window_bounds = array<i64: 1, 128>}, {pipeline_mode = #tpu.pipeline_mode<synchronous>, transform_indices = @transform_4, window_bounds = array<i64: 3, 128, 128>}, {transform_indices = @transform_5, window_bounds = array<i64: 1, 16, 128>}]} {
    %c0 = arith.constant 0 : index
    %c0_0 = arith.constant 0 : index
    %c0_1 = arith.constant 0 : index
    %0 = vector.load %arg1[%c0, %c0_0, %c0_1] : memref<1x16x64xf32, #tpu.memory_space<vmem>>, vector<1x16x64xf32>
    %1 = vector.shape_cast %0 : vector<1x16x64xf32> to vector<16x64xf32>
    %2 = arith.truncf %1 : vector<16x64xf32> to vector<16x64xbf16>
    %c0_2 = arith.constant 0 : index
    %c0_3 = arith.constant 0 : index
    %3 = vector.load %arg2[%c0_2, %c0_3] : memref<64x128xbf16, #tpu.memory_space<vmem>>, vector<64x128xbf16>
    %cst = arith.constant dense<0.000000e+00> : vector<16x128xf32>
    %4 = tpu.matmul %2, %3, %cst {dimension_numbers = #tpu.dot_dimension_numbers<[1], [0], [0], [1], [0, 0, 1, 1], [], []>} : vector<16x64xbf16>, vector<64x128xbf16>, vector<16x128xf32> -> vector<16x128xf32>
    %cst_4 = arith.constant 0.000000e+00 : f32
    %5 = vector.broadcast %cst_4 : f32 to vector<1x64xf32>
    %c0_5 = arith.constant 0 : index
    %c0_6 = arith.constant 0 : index
    %6 = vector.load %arg7[%c0_5, %c0_6] : memref<18x64xf32, #tpu.memory_space<vmem>>, vector<1x64xf32>
    tpu.vector_store %arg7[%c0_5, %c0_6], %5 {strides = array<i32>} : memref<18x64xf32, #tpu.memory_space<vmem>>, vector<1x64xf32>,
    %cst_7 = arith.constant 0.000000e+00 : f32
    %7 = vector.broadcast %cst_7 : f32 to vector<1x64xf32>
    %c17 = arith.constant 17 : index
    %c0_8 = arith.constant 0 : index
    %8 = vector.load %arg7[%c17, %c0_8] : memref<18x64xf32, #tpu.memory_space<vmem>>, vector<1x64xf32>
    tpu.vector_store %arg7[%c17, %c0_8], %7 {strides = array<i32>} : memref<18x64xf32, #tpu.memory_space<vmem>>, vector<1x64xf32>,
    %c1 = arith.constant 1 : index
    %c0_9 = arith.constant 0 : index
    %9 = vector.load %arg7[%c1, %c0_9] : memref<18x64xf32, #tpu.memory_space<vmem>>, vector<16x64xf32>
    tpu.vector_store %arg7[%c1, %c0_9], %1 {strides = array<i32>} : memref<18x64xf32, #tpu.memory_space<vmem>>, vector<16x64xf32>,
    %c0_10 = arith.constant 0 : index
    %c0_11 = arith.constant 0 : index
    %10 = vector.load %arg7[%c0_10, %c0_11] : memref<18x64xf32, #tpu.memory_space<vmem>>, vector<16x64xf32>
    %11 = arith.truncf %10 : vector<16x64xf32> to vector<16x64xbf16>
    %c0_12 = arith.constant 0 : index
    %c0_13 = arith.constant 0 : index
    %c0_14 = arith.constant 0 : index
    %12 = vector.load %arg3[%c0_12, %c0_13, %c0_14] : memref<3x64x128xbf16, #tpu.memory_space<vmem>>, vector<1x64x128xbf16>
    %13 = vector.shape_cast %12 : vector<1x64x128xbf16> to vector<64x128xbf16>
    %cst_15 = arith.constant dense<0.000000e+00> : vector<16x128xf32>
    %14 = tpu.matmul %11, %13, %cst_15 {dimension_numbers = #tpu.dot_dimension_numbers<[1], [0], [0], [1], [0, 0, 1, 1], [], []>} : vector<16x64xbf16>, vector<64x128xbf16>, vector<16x128xf32> -> vector<16x128xf32>
    %c1_16 = arith.constant 1 : index
    %c0_17 = arith.constant 0 : index
    %c0_18 = arith.constant 0 : index
    %15 = vector.load %arg3[%c1_16, %c0_17, %c0_18] : memref<3x64x128xbf16, #tpu.memory_space<vmem>>, vector<1x64x128xbf16>
    %16 = vector.shape_cast %15 : vector<1x64x128xbf16> to vector<64x128xbf16>
    %cst_19 = arith.constant dense<0.000000e+00> : vector<16x128xf32>
    %17 = tpu.matmul %2, %16, %cst_19 {dimension_numbers = #tpu.dot_dimension_numbers<[1], [0], [0], [1], [0, 0, 1, 1], [], []>} : vector<16x64xbf16>, vector<64x128xbf16>, vector<16x128xf32> -> vector<16x128xf32>
    %18 = arith.addf %14, %17 : vector<16x128xf32>
    %c2 = arith.constant 2 : index
    %c0_20 = arith.constant 0 : index
    %19 = vector.load %arg7[%c2, %c0_20] : memref<18x64xf32, #tpu.memory_space<vmem>>, vector<16x64xf32>
    %20 = arith.truncf %19 : vector<16x64xf32> to vector<16x64xbf16>
    %c2_21 = arith.constant 2 : index
    %c0_22 = arith.constant 0 : index
    %c0_23 = arith.constant 0 : index
    %21 = vector.load %arg3[%c2_21, %c0_22, %c0_23] : memref<3x64x128xbf16, #tpu.memory_space<vmem>>, vector<1x64x128xbf16>
    %22 = vector.shape_cast %21 : vector<1x64x128xbf16> to vector<64x128xbf16>
    %cst_24 = arith.constant dense<0.000000e+00> : vector<16x128xf32>
    %23 = tpu.matmul %20, %22, %cst_24 {dimension_numbers = #tpu.dot_dimension_numbers<[1], [0], [0], [1], [0, 0, 1, 1], [], []>} : vector<16x64xbf16>, vector<64x128xbf16>, vector<16x128xf32> -> vector<16x128xf32>
    %24 = arith.addf %18, %23 : vector<16x128xf32>
    %c0_25 = arith.constant 0 : index
    %c0_26 = arith.constant 0 : index
    %25 = vector.load %arg4[%c0_25, %c0_26] : memref<1x128xf32, #tpu.memory_space<vmem>>, vector<1x128xf32>
    %26 = vector.broadcast %25 : vector<1x128xf32> to vector<16x128xf32>
    %27 = arith.addf %24, %26 : vector<16x128xf32>
    %cst_27 = arith.constant 0.000000e+00 : f32
    %28 = vector.broadcast %cst_27 : f32 to vector<16x128xf32>
    %29 = arith.maximumf %27, %28 : vector<16x128xf32>
    %cst_28 = arith.constant 0.000000e+00 : f32
    %30 = vector.broadcast %cst_28 : f32 to vector<1x128xf32>
    %c0_29 = arith.constant 0 : index
    %c0_30 = arith.constant 0 : index
    %31 = vector.load %arg8[%c0_29, %c0_30] : memref<18x128xf32, #tpu.memory_space<vmem>>, vector<1x128xf32>
    tpu.vector_store %arg8[%c0_29, %c0_30], %30 {strides = array<i32>} : memref<18x128xf32, #tpu.memory_space<vmem>>, vector<1x128xf32>,
    %cst_31 = arith.constant 0.000000e+00 : f32
    %32 = vector.broadcast %cst_31 : f32 to vector<1x128xf32>
    %c17_32 = arith.constant 17 : index
    %c0_33 = arith.constant 0 : index
    %33 = vector.load %arg8[%c17_32, %c0_33] : memref<18x128xf32, #tpu.memory_space<vmem>>, vector<1x128xf32>
    tpu.vector_store %arg8[%c17_32, %c0_33], %32 {strides = array<i32>} : memref<18x128xf32, #tpu.memory_space<vmem>>, vector<1x128xf32>,
    %c1_34 = arith.constant 1 : index
    %c0_35 = arith.constant 0 : index
    %34 = vector.load %arg8[%c1_34, %c0_35] : memref<18x128xf32, #tpu.memory_space<vmem>>, vector<16x128xf32>
    tpu.vector_store %arg8[%c1_34, %c0_35], %29 {strides = array<i32>} : memref<18x128xf32, #tpu.memory_space<vmem>>, vector<16x128xf32>,
    %c0_36 = arith.constant 0 : index
    %c0_37 = arith.constant 0 : index
    %35 = vector.load %arg8[%c0_36, %c0_37] : memref<18x128xf32, #tpu.memory_space<vmem>>, vector<16x128xf32>
    %36 = arith.truncf %35 : vector<16x128xf32> to vector<16x128xbf16>
    %c0_38 = arith.constant 0 : index
    %c0_39 = arith.constant 0 : index
    %c0_40 = arith.constant 0 : index
    %37 = vector.load %arg5[%c0_38, %c0_39, %c0_40] : memref<3x128x128xbf16, #tpu.memory_space<vmem>>, vector<1x128x128xbf16>
    %38 = vector.shape_cast %37 : vector<1x128x128xbf16> to vector<128x128xbf16>
    %cst_41 = arith.constant dense<0.000000e+00> : vector<16x128xf32>
    %39 = tpu.matmul %36, %38, %cst_41 {dimension_numbers = #tpu.dot_dimension_numbers<[1], [0], [0], [1], [0, 0, 1, 1], [], []>} : vector<16x128xbf16>, vector<128x128xbf16>, vector<16x128xf32> -> vector<16x128xf32>
    %40 = arith.truncf %29 : vector<16x128xf32> to vector<16x128xbf16>
    %c1_42 = arith.constant 1 : index
    %c0_43 = arith.constant 0 : index
    %c0_44 = arith.constant 0 : index
    %41 = vector.load %arg5[%c1_42, %c0_43, %c0_44] : memref<3x128x128xbf16, #tpu.memory_space<vmem>>, vector<1x128x128xbf16>
    %42 = vector.shape_cast %41 : vector<1x128x128xbf16> to vector<128x128xbf16>
    %cst_45 = arith.constant dense<0.000000e+00> : vector<16x128xf32>
    %43 = tpu.matmul %40, %42, %cst_45 {dimension_numbers = #tpu.dot_dimension_numbers<[1], [0], [0], [1], [0, 0, 1, 1], [], []>} : vector<16x128xbf16>, vector<128x128xbf16>, vector<16x128xf32> -> vector<16x128xf32>
    %44 = arith.addf %39, %43 : vector<16x128xf32>
    %c2_46 = arith.constant 2 : index
    %c0_47 = arith.constant 0 : index
    %45 = vector.load %arg8[%c2_46, %c0_47] : memref<18x128xf32, #tpu.memory_space<vmem>>, vector<16x128xf32>
    %46 = arith.truncf %45 : vector<16x128xf32> to vector<16x128xbf16>
    %c2_48 = arith.constant 2 : index
    %c0_49 = arith.constant 0 : index
    %c0_50 = arith.constant 0 : index
    %47 = vector.load %arg5[%c2_48, %c0_49, %c0_50] : memref<3x128x128xbf16, #tpu.memory_space<vmem>>, vector<1x128x128xbf16>
    %48 = vector.shape_cast %47 : vector<1x128x128xbf16> to vector<128x128xbf16>
    %cst_51 = arith.constant dense<0.000000e+00> : vector<16x128xf32>
    %49 = tpu.matmul %46, %48, %cst_51 {dimension_numbers = #tpu.dot_dimension_numbers<[1], [0], [0], [1], [0, 0, 1, 1], [], []>} : vector<16x128xbf16>, vector<128x128xbf16>, vector<16x128xf32> -> vector<16x128xf32>
    %50 = arith.addf %44, %49 : vector<16x128xf32>
    %51 = arith.addf %4, %50 : vector<16x128xf32>
    %cst_52 = arith.constant 0.000000e+00 : f32
    %52 = vector.broadcast %cst_52 : f32 to vector<16x128xf32>
    %53 = arith.maximumf %51, %52 : vector<16x128xf32>
    %c0_53 = arith.constant 0 : index
    %c0_54 = arith.constant 0 : index
    %c0_55 = arith.constant 0 : index
    %54 = vector.load %arg6[%c0_53, %c0_54, %c0_55] : memref<1x16x128xf32, #tpu.memory_space<vmem>>, vector<1x16x128xf32>
    %55 = vector.shape_cast %54 : vector<1x16x128xf32> to vector<16x128xf32>
    %56 = vector.shape_cast %53 : vector<16x128xf32> to vector<1x16x128xf32>
    tpu.vector_store %arg6[%c0_53, %c0_54, %c0_55], %56 {strides = array<i32>} : memref<1x16x128xf32, #tpu.memory_space<vmem>>, vector<1x16x128xf32>,
    return
  }
  func.func @transform_0(%arg0: i32) -> (i32, i32, i32) {
    %c0_i32 = arith.constant 0 : i32
    %c0_i32_0 = arith.constant 0 : i32
    %c0_i32_1 = arith.constant 0 : i32
    return %arg0, %c0_i32, %c0_i32_0 : i32, i32, i32
  }
  func.func @transform_1(%arg0: i32) -> (i32, i32) {
    %c0_i32 = arith.constant 0 : i32
    %c0_i32_0 = arith.constant 0 : i32
    %c0_i32_1 = arith.constant 0 : i32
    return %c0_i32, %c0_i32_0 : i32, i32
  }
  func.func @transform_2(%arg0: i32) -> (i32, i32, i32) {
    %c0_i32 = arith.constant 0 : i32
    %c0_i32_0 = arith.constant 0 : i32
    %c0_i32_1 = arith.constant 0 : i32
    %c0_i32_2 = arith.constant 0 : i32
    return %c0_i32, %c0_i32_0, %c0_i32_1 : i32, i32, i32
  }
  func.func @transform_3(%arg0: i32) -> (i32, i32) {
    %c0_i32 = arith.constant 0 : i32
    %c0_i32_0 = arith.constant 0 : i32
    %c0_i32_1 = arith.constant 0 : i32
    return %c0_i32, %c0_i32_0 : i32, i32
  }
  func.func @transform_4(%arg0: i32) -> (i32, i32, i32) {
    %c0_i32 = arith.constant 0 : i32
    %c0_i32_0 = arith.constant 0 : i32
    %c0_i32_1 = arith.constant 0 : i32
    %c0_i32_2 = arith.constant 0 : i32
    return %c0_i32, %c0_i32_0, %c0_i32_1 : i32, i32, i32
  }
  func.func @transform_5(%arg0: i32) -> (i32, i32, i32) {
    %c0_i32 = arith.constant 0 : i32
    %c0_i32_0 = arith.constant 0 : i32
    %c0_i32_1 = arith.constant 0 : i32
    return %arg0, %c0_i32, %c0_i32_0 : i32, i32, i32
  }
}

</mosaic_0001>

<llo_original>
// kernel: tile.8
$region0: #{tile.8}
  #allocation0 [shape = 's32[1]{0}', space=sflag, size = 0x4, scoped, tag = 'scoped memory for tile.8']
  %s0 = inlined_call_operand.vmem [shape: f32[8], index: 0, kind: input, shape index: {}]
  %s1 = inlined_call_operand.vmem [shape: f32[16,8], index: 1, kind: output, shape index: {}]
  // Predicated region
  $region2: #{tile.8} parent=0 // pred_check
    _
  $region3: #{tile.8} parent=0 // pred_check_branch
    %3 = sbr.rel (0) target = $region5
  $region4: #{tile.8} parent=0 // pred_region
    _
  $region5: #{tile.8} parent=0 // pred_fallthru
    _
  %v4 = vld [vmem:[%s0] ss:$0 sm:$0xff]
  %5 = vst [vmem:[%s1] sm:$0xff] %v4
  %s6 = scalar_lea.vmem %s1, 8
  %7 = vst [vmem:[%s6] sm:$0xff] %v4

// kernel: tile.9
$region0: #{tile.9}
  %s0 = inlined_call_operand.vmem [shape: f32[16,8], index: 0, kind: input, shape index: {}]
  %s1 = inlined_call_operand.vmem [shape: f32[1,128], index: 1, kind: output, shape index: {}]
  $region1: #{tile.9} parent=0
    #allocation0 [shape = 'u8[4096]{0}', space=vmem, size = 0x1000, scoped, tag = 'scoped mem for output reshape']
    %v2 = vld [vmem:[%s0] sm:$0x1]
    %vm3 = vcmask 64512
    %4 = vst.msk [vmem:[#allocation0] sm:$0x1] %vm3, %v2
    %s5 = scalar_lea.vmem %s0, 15
    %v6 = vld [vmem:[%s5] sm:$0x1]
    %7 = vrot.lane.b32.xlu0 %v6, 120
    %v8 = vpop.permute.xlu0 %7
    %vm9 = vcmask 1048512
    %10 = vst.msk [vmem:[#allocation0] sm:$0x1] %vm9, %v8
    %s11 = scalar_lea.vmem %s0, 14
    %v12 = vld [vmem:[%s11] sm:$0x1]
    %13 = vrot.lane.b32.xlu0 %v12, 112
    %v14 = vpop.permute.xlu0 %13
    %vm15 = vcmask 982912
    %16 = vst.msk [vmem:[#allocation0] sm:$0x1] %vm15, %v14
    %s17 = scalar_lea.vmem %s0, 13
    %v18 = vld [vmem:[%s17] sm:$0x1]
    %19 = vrot.lane.b32.xlu0 %v18, 104
    %v20 = vpop.permute.xlu0 %19
    %vm21 = vcmask 917312
    %22 = vst.msk [vmem:[#allocation0] sm:$0x1] %vm21, %v20
    %s23 = scalar_lea.vmem %s0, 12
    %v24 = vld [vmem:[%s23] sm:$0x1]
    %25 = vrot.lane.b32.xlu0 %v24, 96
    %v26 = vpop.permute.xlu0 %25
    %vm27 = vcmask 851712
    %28 = vst.msk [vmem:[#allocation0] sm:$0x1] %vm27, %v26
    %s29 = scalar_lea.vmem %s0, 11
    %v30 = vld [vmem:[%s29] sm:$0x1]
    %31 = vrot.lane.b32.xlu0 %v30, 88
    %v32 = vpop.permute.xlu0 %31
    %vm33 = vcmask 786112
    %34 = vst.msk [vmem:[#allocation0] sm:$0x1] %vm33, %v32
    %s35 = scalar_lea.vmem %s0, 10
    %v36 = vld [vmem:[%s35] sm:$0x1]
    %37 = vrot.lane.b32.xlu0 %v36, 80
    %v38 = vpop.permute.xlu0 %37
    %vm39 = vcmask 720512
    %40 = vst.msk [vmem:[#allocation0] sm:$0x1] %vm39, %v38
    %s41 = scalar_lea.vmem %s0, 9
    %v42 = vld [vmem:[%s41] sm:$0x1]
    %43 = vrot.lane.b32.xlu0 %v42, 72
    %v44 = vpop.permute.xlu0 %43
    %vm45 = vcmask 654912
    %46 = vst.msk [vmem:[#allocation0] sm:$0x1] %vm45, %v44
    %s47 = scalar_lea.vmem %s0, 8
    %v48 = vld [vmem:[%s47] sm:$0x1]
    %49 = vrot.lane.b32.xlu0 %v48, 64
    %v50 = vpop.permute.xlu0 %49
    %vm51 = vcmask 589312
    %52 = vst.msk [vmem:[#allocation0] sm:$0x1] %vm51, %v50
    %s53 = scalar_lea.vmem %s0, 7
    %v54 = vld [vmem:[%s53] sm:$0x1]
    %55 = vrot.lane.b32.xlu0 %v54, 56
    %v56 = vpop.permute.xlu0 %55
    %vm57 = vcmask 523712
    %58 = vst.msk [vmem:[#allocation0] sm:$0x1] %vm57, %v56
    %s59 = scalar_lea.vmem %s0, 6
    %v60 = vld [vmem:[%s59] sm:$0x1]
    %61 = vrot.lane.b32.xlu0 %v60, 48
    %v62 = vpop.permute.xlu0 %61
    %vm63 = vcmask 458112
    %64 = vst.msk [vmem:[#allocation0] sm:$0x1] %vm63, %v62
    %s65 = scalar_lea.vmem %s0, 5
    %v66 = vld [vmem:[%s65] sm:$0x1]
    %67 = vrot.lane.b32.xlu0 %v66, 40
    %v68 = vpop.permute.xlu0 %67
    %vm69 = vcmask 392512
    %70 = vst.msk [vmem:[#allocation0] sm:$0x1] %vm69, %v68
    %s71 = scalar_lea.vmem %s0, 4
    %v72 = vld [vmem:[%s71] sm:$0x1]
    %73 = vrot.lane.b32.xlu0 %v72, 32
    %v74 = vpop.permute.xlu0 %73
    %vm75 = vcmask 326912
    %76 = vst.msk [vmem:[#allocation0] sm:$0x1] %vm75, %v74
    %s77 = scalar_lea.vmem %s0, 3
    %v78 = vld [vmem:[%s77] sm:$0x1]
    %79 = vrot.lane.b32.xlu0 %v78, 24
    %v80 = vpop.permute.xlu0 %79
    %vm81 = vcmask 261312
    %82 = vst.msk [vmem:[#allocation0] sm:$0x1] %vm81, %v80
    %s83 = scalar_lea.vmem %s0, 2
    %v84 = vld [vmem:[%s83] sm:$0x1]
    %85 = vrot.lane.b32.xlu0 %v84, 16
    %v86 = vpop.permute.xlu0 %85
    %vm87 = vcmask 195712
    %88 = vst.msk [vmem:[#allocation0] sm:$0x1] %vm87, %v86
    %s89 = scalar_lea.vmem %s0, 1
    %v90 = vld [vmem:[%s89] sm:$0x1]
    %91 = vrot.lane.b32.xlu0 %v90, 8
    %v92 = vpop.permute.xlu0 %91
    %vm93 = vcmask 130112
    %94 = vst.msk [vmem:[#allocation0] sm:$0x1] %vm93, %v92
    %s96 = sshll.u32 1, 1
    %s97 = ssub.s32 %s96, 1
    %v99 = vld [vmem:[#allocation0] sm:%s97]
    %s100 = sshll.u32 1, 1
    %s101 = ssub.s32 %s100, 1
    %102 = vst [vmem:[%s1] sm:%s101] %v99

// kernel: refinement_block_forward.1
$region0: #{refinement_block_forward.1}
  #allocation0 [shape = 'u32[]', space=smem, size = 0x4, offset = 0x4, fixed_abs, tag = 'smem constant byte address 0x4 - core index']
  #allocation1 [shape = 'u32[144,128]{1,0:T(1,128)}', space=vmem, size = 0x12000, scoped, tag = 'internal scratch']
  #allocation2 [shape = 'f32[18,64]{1,0:T(8,128)}', space=vmem, size = 0x3000, scoped, tag = 'scratch operand']
  #allocation3 [shape = 'f32[18,128]{1,0:T(8,128)}', space=vmem, size = 0x3000, scoped, tag = 'scratch operand']
  %s0 = inlined_call_operand.vmem [shape: f32[2,16,64], index: 0, kind: input, shape index: {}]
  %s1 = inlined_call_operand.vmem [shape: bf16[64,128], index: 1, kind: input, shape index: {}]
  %s2 = inlined_call_operand.vmem [shape: bf16[3,64,128], index: 2, kind: input, shape index: {}]
  %s3 = inlined_call_operand.vmem [shape: f32[1,128], index: 3, kind: input, shape index: {}]
  %s4 = inlined_call_operand.vmem [shape: bf16[3,128,128], index: 4, kind: input, shape index: {}]
  %s5 = inlined_call_operand.vmem [shape: f32[2,16,128], index: 5, kind: output, shape index: {}]
  %s6 = sld [smem:[#allocation0]]
  $region53: #{refinement_block_forward.1} parent=0
    _
  %s8 = ssub.s32 1, %s6
  %s9 = scalar_select 0, %s8, %s6
  loop: start=0, step=1, limit=4
  $region2: #{refinement_block_forward.1} parent=0 // loop_pre_header
    _
  $region3: #{refinement_block_forward.1} parent=0 // loop_header
    %s11 = sphi 0, %s15
    %p12 = scmp.ge.s32.totalorder %s11, 4
    %s21 = sphi 0, %s23
    %s24 = sphi 0, %s21
    %s25 = sphi 0, %s24
    %s41 = sphi 0, %s25
    %s45 = sphi 0, %s45
    %s47 = sphi 0, %s45
    %s48 = sphi 0, %s47
    %s62 = sphi 0, %s48
    %s66 = sphi 0, %s66
    %s68 = sphi 0, %s66
    %s69 = sphi 0, %s68
    %s83 = sphi 0, %s69
    %s87 = sphi 0, %s87
    %s89 = sphi 0, %s87
    %s90 = sphi 0, %s89
    %s104 = sphi 0, %s90
    %s108 = sphi 0, %s108
    %s110 = sphi 0, %s108
    %s111 = sphi 0, %s110
    %s125 = sphi 0, %s111
    %s131 = sphi 0, %s133
    %s134 = sphi 0, %s131
    %s135 = sphi 0, %s134
    %s151 = sphi 0, %s135
  $region4: #{refinement_block_forward.1} parent=0 // loop_header_branch
    %14 = sbr.rel (%p12) target = $region8
  $region5: #{refinement_block_forward.1} parent=0 // loop_body
    %s16 = ssub.s32 %s11, 1
    %s17 = ssub.s32 %s11, 2
    %s18 = sadd.s32 %s11, 1
    %s19 = ssub.s32 %s11, %s18
    %p20 = scmp.eq.s32.totalorder %s19, 0
    %s22 = sadd.s32 %s21, 1
    %s23 = scalar_select %p20, %s21, %s22
    %p26 = pneg %p20
    %p27 = scmp.eq.s32.totalorder %s11, 1
    %p28 = por %p26, %p27
    %p29 = scmp.ne.s32.totalorder %s21, %s24
    %p30 = scmp.eq.s32.totalorder %s11, 0
    %p31 = por %p29, %p30
    %p32 = scmp.ne.s32.totalorder %s21, %s24
    %p33 = scmp.eq.s32.totalorder %s16, 1
    %p34 = por %p32, %p33
    %p35 = scmp.ne.s32.totalorder %s24, %s25
    %p36 = scmp.eq.s32.totalorder %s16, 0
    %p37 = por %p35, %p36
    %p38 = scmp.ne.s32.totalorder %s24, %s25
    %p39 = scmp.eq.s32.totalorder %s17, 1
    %p40 = por %p38, %p39
    %p42 = scmp.ne.s32.totalorder %s25, %s41
    %p43 = scmp.eq.s32.totalorder %s17, 0
    %p44 = por %p42, %p43
    %s46 = sadd.s32 %s45, 1
    %p49 = scmp.eq.s32.totalorder %s11, 1
    %p50 = scmp.ne.s32.totalorder %s45, %s47
    %p51 = scmp.eq.s32.totalorder %s11, 0
    %p52 = por %p50, %p51
    %p53 = scmp.ne.s32.totalorder %s45, %s47
    %p54 = scmp.eq.s32.totalorder %s16, 1
    %p55 = por %p53, %p54
    %p56 = scmp.ne.s32.totalorder %s47, %s48
    %p57 = scmp.eq.s32.totalorder %s16, 0
    %p58 = por %p56, %p57
    %p59 = scmp.ne.s32.totalorder %s47, %s48
    %p60 = scmp.eq.s32.totalorder %s17, 1
    %p61 = por %p59, %p60
    %p63 = scmp.ne.s32.totalorder %s48, %s62
    %p64 = scmp.eq.s32.totalorder %s17, 0
    %p65 = por %p63, %p64
    %s67 = sadd.s32 %s66, 1
    %p70 = scmp.eq.s32.totalorder %s11, 1
    %p71 = scmp.ne.s32.totalorder %s66, %s68
    %p72 = scmp.eq.s32.totalorder %s11, 0
    %p73 = por %p71, %p72
    %p74 = scmp.ne.s32.totalorder %s66, %s68
    %p75 = scmp.eq.s32.totalorder %s16, 1
    %p76 = por %p74, %p75
    %p77 = scmp.ne.s32.totalorder %s68, %s69
    %p78 = scmp.eq.s32.totalorder %s16, 0
    %p79 = por %p77, %p78
    %p80 = scmp.ne.s32.totalorder %s68, %s69
    %p81 = scmp.eq.s32.totalorder %s17, 1
    %p82 = por %p80, %p81
    %p84 = scmp.ne.s32.totalorder %s69, %s83
    %p85 = scmp.eq.s32.totalorder %s17, 0
    %p86 = por %p84, %p85
    %s88 = sadd.s32 %s87, 1
    %p91 = scmp.eq.s32.totalorder %s11, 1
    %p92 = scmp.ne.s32.totalorder %s87, %s89
    %p93 = scmp.eq.s32.totalorder %s11, 0
    %p94 = por %p92, %p93
    %p95 = scmp.ne.s32.totalorder %s87, %s89
    %p96 = scmp.eq.s32.totalorder %s16, 1
    %p97 = por %p95, %p96
    %p98 = scmp.ne.s32.totalorder %s89, %s90
    %p99 = scmp.eq.s32.totalorder %s16, 0
    %p100 = por %p98, %p99
    %p101 = scmp.ne.s32.totalorder %s89, %s90
    %p102 = scmp.eq.s32.totalorder %s17, 1
    %p103 = por %p101, %p102
    %p105 = scmp.ne.s32.totalorder %s90, %s104
    %p106 = scmp.eq.s32.totalorder %s17, 0
    %p107 = por %p105, %p106
    %s109 = sadd.s32 %s108, 1
    %p112 = scmp.eq.s32.totalorder %s11, 1
    %p113 = scmp.ne.s32.totalorder %s108, %s110
    %p114 = scmp.eq.s32.totalorder %s11, 0
    %p115 = por %p113, %p114
    %p116 = scmp.ne.s32.totalorder %s108, %s110
    %p117 = scmp.eq.s32.totalorder %s16, 1
    %p118 = por %p116, %p117
    %p119 = scmp.ne.s32.totalorder %s110, %s111
    %p120 = scmp.eq.s32.totalorder %s16, 0
    %p121 = por %p119, %p120
    %p122 = scmp.ne.s32.totalorder %s110, %s111
    %p123 = scmp.eq.s32.totalorder %s17, 1
    %p124 = por %p122, %p123
    %p126 = scmp.ne.s32.totalorder %s111, %s125
    %p127 = scmp.eq.s32.totalorder %s17, 0
    %p128 = por %p126, %p127
    %s129 = ssub.s32 %s11, %s18
    %p130 = scmp.eq.s32.totalorder %s129, 0
    %s132 = sadd.s32 %s131, 1
    %s133 = scalar_select %p130, %s131, %s132
    %p136 = pneg %p130
    %p137 = scmp.eq.s32.totalorder %s11, 1
    %p138 = por %p136, %p137
    %p139 = scmp.ne.s32.totalorder %s131, %s134
    %p140 = scmp.eq.s32.totalorder %s11, 0
    %p141 = por %p139, %p140
    %p142 = scmp.ne.s32.totalorder %s131, %s134
    %p143 = scmp.eq.s32.totalorder %s16, 1
    %p144 = por %p142, %p143
    %p145 = scmp.ne.s32.totalorder %s134, %s135
    %p146 = scmp.eq.s32.totalorder %s16, 0
    %p147 = por %p145, %p146
    %p148 = scmp.ne.s32.totalorder %s134, %s135
    %p149 = scmp.eq.s32.totalorder %s17, 1
    %p150 = por %p148, %p149
    %p152 = scmp.ne.s32.totalorder %s135, %s151
    %p153 = scmp.eq.s32.totalorder %s17, 0
    %p154 = por %p152, %p153
    %p155 = scmp.le.s32.totalorder 1, %s11
    %p156 = scmp.lt.s32.totalorder %s11, 3
    %p157 = pnand %p155, %p156
    %p158 = pneg %p157
    // Predicated region
    $region9: #{refinement_block_forward.1} parent=5 // pred_check
      _
    $region10: #{refinement_block_forward.1} parent=5 // pred_check_branch
      %160 = sbr.rel (%p157) target = $region12
    $region11: #{refinement_block_forward.1} parent=5 // pred_region
      %s161 = ssub.s32 %s11, 1
      // Predicated region
      $region13: #{refinement_block_forward.1} parent=11 // pred_check
        %p162 = pneg %p58
      $region14: #{refinement_block_forward.1} parent=11 // pred_check_branch
        %164 = sbr.rel (%p162) target = $region16
      $region15: #{refinement_block_forward.1} parent=11 // pred_region
        _
      $region16: #{refinement_block_forward.1} parent=11 // pred_fallthru
        _
      // Predicated region
      $region17: #{refinement_block_forward.1} parent=11 // pred_check
        %p165 = pneg %p79
      $region18: #{refinement_block_forward.1} parent=11 // pred_check_branch
        %167 = sbr.rel (%p165) target = $region20
      $region19: #{refinement_block_forward.1} parent=11 // pred_region
        _
      $region20: #{refinement_block_forward.1} parent=11 // pred_fallthru
        _
      // Predicated region
      $region21: #{refinement_block_forward.1} parent=11 // pred_check
        %p168 = pneg %p100
      $region22: #{refinement_block_forward.1} parent=11 // pred_check_branch
        %170 = sbr.rel (%p168) target = $region24
      $region23: #{refinement_block_forward.1} parent=11 // pred_region
        _
      $region24: #{refinement_block_forward.1} parent=11 // pred_fallthru
        _
      // Predicated region
      $region25: #{refinement_block_forward.1} parent=11 // pred_check
        %p171 = pneg %p121
      $region26: #{refinement_block_forward.1} parent=11 // pred_check_branch
        %173 = sbr.rel (%p171) target = $region28
      $region27: #{refinement_block_forward.1} parent=11 // pred_region
        _
      $region28: #{refinement_block_forward.1} parent=11 // pred_fallthru
        _
    $region12: #{refinement_block_forward.1} parent=5 // pred_fallthru
      _
    %p174 = scmp.lt.s32.totalorder %s11, 2
    // Predicated region
    $region29: #{refinement_block_forward.1} parent=5 // pred_check
      %p175 = pneg %p174
    $region30: #{refinement_block_forward.1} parent=5 // pred_check_branch
      %177 = sbr.rel (%p175) target = $region32
    $region31: #{refinement_block_forward.1} parent=5 // pred_region
      // Predicated region
      $region33: #{refinement_block_forward.1} parent=31 // pred_check
        %p178 = pneg %p31
      $region34: #{refinement_block_forward.1} parent=31 // pred_check_branch
        %180 = sbr.rel (%p178) target = $region36
      $region35: #{refinement_block_forward.1} parent=31 // pred_region
        %p181 = scmp.lt.s32.totalorder %s11, 1
        %s182 = scalar_select %p181, %s11, 1
        %s183 = smul.addr %s182, 2
        %s184 = smul.addr %s183, 8
        %s185 = scalar_lea.vmem %s0, %s184
      $region36: #{refinement_block_forward.1} parent=31 // pred_fallthru
        _
    $region32: #{refinement_block_forward.1} parent=5 // pred_fallthru
      _
    %p186 = scmp.le.s32.totalorder 1, %s11
    %p187 = scmp.lt.s32.totalorder %s11, 3
    %p188 = pnand %p186, %p187
    %p189 = pneg %p188
    // Predicated region
    $region37: #{refinement_block_forward.1} parent=5 // pred_check
      _
    $region38: #{refinement_block_forward.1} parent=5 // pred_check_branch
      %191 = sbr.rel (%p188) target = $region40
    $region39: #{refinement_block_forward.1} parent=5 // pred_region
      %s192 = ssub.s32 %s11, 1
      %p193 = scmp.lt.s32.totalorder %s16, 1
      %s194 = scalar_select %p193, %s16, 1
      %s195 = smul.addr %s194, 2
      %s196 = smul.addr %s195, 8
      %s197 = scalar_lea.vmem %s0, %s196
      %p198 = pneg %p37
      %p199 = pneg %p34
      %p200 = pneg %p58
      %p201 = pneg %p55
      %p202 = pneg %p79
      %p203 = pneg %p76
      %p204 = pneg %p100
      %p205 = pneg %p97
      %p206 = pneg %p121
      %p207 = pneg %p118
      %p208 = pneg %p147
      %p209 = pneg %p144
      %p210 = scmp.lt.s32.totalorder %s16, 1
      %s211 = scalar_select %p210, %s16, 1
      %s212 = smul.addr %s211, 2
      %s213 = smul.addr %s212, 8
      %s214 = scalar_lea.vmem %s5, %s213
      %p215 = scmp.lt.s32.totalorder %s16, 1
      %s216 = scalar_select %p215, %s16, 1
      %s217 = smul.addr %s216, 2
      %s218 = smul.addr %s217, 8
      %s219 = scalar_lea.vmem %s0, %s218
      %p220 = scmp.lt.s32.totalorder %s16, 1
      %s221 = scalar_select %p220, %s16, 1
      %s222 = smul.addr %s221, 2
      %s223 = smul.addr %s222, 8
      %s224 = scalar_lea.vmem %s5, %s223
      %v226 = vld [vmem:[%s219] sm:$0xff]
      %v227 = vld [vmem:[%s219 + $0x8] sm:$0xff]
      %v228 = vpack.c.bf16 %v227, %v226
      %v229 = vld [vmem:[%s1] sm:$0xf]
      %v230 = vld [vmem:[%s1 + $0x4] sm:$0xf]
      %v231 = vld [vmem:[%s1 + $0x8] sm:$0xf]
      %v232 = vld [vmem:[%s1 + $0xc] sm:$0xf]
      %v233 = vld [vmem:[%s1 + $0x10] sm:$0xf]
      %v234 = vld [vmem:[%s1 + $0x14] sm:$0xf]
      %v235 = vld [vmem:[%s1 + $0x18] sm:$0xf]
      %v236 = vld [vmem:[%s1 + $0x1c] sm:$0xf]
      %vm237 = vcmask 516096
      %238 = vst.msk [vmem:[#allocation2] sm:$0x1] %vm237, 0.0
      %239 = vst.msk [vmem:[#allocation2 + $0x11] sm:$0x1] %vm237, 0.0
      %vm240 = vcmask 523264
      %241 = vst.msk [vmem:[#allocation2 + $0x1] sm:$0xff] %vm240, %v226
      %242 = vst.msk [vmem:[#allocation2 + $0x9] sm:$0xff] %vm240, %v227
      %v243 = vld [vmem:[#allocation2] sm:$0xff]
      %v244 = vld [vmem:[#allocation2 + $0x8] sm:$0xff]
      %v245 = vpack.c.bf16 %v244, %v243
      %v246 = vld [vmem:[%s2] sm:$0xf]
      %v247 = vld [vmem:[%s2 + $0x4] sm:$0xf]
      %v248 = vld [vmem:[%s2 + $0x8] sm:$0xf]
      %v249 = vld [vmem:[%s2 + $0xc] sm:$0xf]
      %v250 = vld [vmem:[%s2 + $0x10] sm:$0xf]
      %v251 = vld [vmem:[%s2 + $0x14] sm:$0xf]
      %v252 = vld [vmem:[%s2 + $0x18] sm:$0xf]
      %v253 = vld [vmem:[%s2 + $0x1c] sm:$0xf]
      %s254 = scalar_lea.vmem %s2, 32
      %v255 = vld [vmem:[%s254] sm:$0xf]
      %v256 = vld [vmem:[%s254 + $0x4] sm:$0xf]
      %v257 = vld [vmem:[%s254 + $0x8] sm:$0xf]
      %v258 = vld [vmem:[%s254 + $0xc] sm:$0xf]
      %v259 = vld [vmem:[%s254 + $0x10] sm:$0xf]
      %v260 = vld [vmem:[%s254 + $0x14] sm:$0xf]
      %v261 = vld [vmem:[%s254 + $0x18] sm:$0xf]
      %v262 = vld [vmem:[%s254 + $0x1c] sm:$0xf]
      %v271 = vunpack.c.l.b16 %v255
      %v272 = vunpack.c.l.b16 %v256
      %v273 = vunpack.c.l.b16 %v257
      %v274 = vunpack.c.l.b16 %v258
      %v275 = vunpack.c.l.b16 %v259
      %v276 = vunpack.c.l.b16 %v260
      %v277 = vunpack.c.l.b16 %v261
      %v278 = vunpack.c.l.b16 %v262
      %v279 = vpack.c.b16 %v272, %v271
      %v280 = vpack.c.b16 %v274, %v273
      %v281 = vpack.c.b16 %v276, %v275
      %v282 = vpack.c.b16 %v278, %v277
      %v288 = vsel %vm240, %v228, 0
      %290 = vmatprep.subr.bf16.mxu0 0
      %291 = vmatpush1.bf16.msra.mxu0 0
      %292 = vmatprep.subr.bf16.mxu0 0
      %293 = vmatpush1.bf16.msra.mxu0 0
      %294 = vmatprep.subr.bf16.mxu0 0
      %295 = vmatpush1.bf16.msra.mxu0 0
      %296 = vmatprep.subr.bf16.mxu0 0
      %297 = vmatpush1.bf16.msra.mxu0 0
      %298 = vmatprep.subr.bf16.mxu0 0
      %299 = vmatpush1.bf16.msra.mxu0 %v282
      %300 = vmatprep.subr.bf16.mxu0 0
      %301 = vmatpush1.bf16.msra.mxu0 %v281
      %302 = vmatprep.subr.bf16.mxu0 0
      %303 = vmatpush1.bf16.msra.mxu0 %v280
      %304 = vmatprep.subr.bf16.mxu0 0
      %305 = vmatpush1.bf16.msra.mxu0 %v279
      %306 = vmatprep.subr.bf16.mxu0 0
      %307 = vmatpush2.bf16.msra.mxu0 0
      %308 = vmatprep.subr.bf16.mxu0 0
      %309 = vmatpush2.bf16.msra.mxu0 0
      %310 = vmatprep.subr.bf16.mxu0 0
      %311 = vmatpush2.bf16.msra.mxu0 0
      %312 = vmatprep.subr.bf16.mxu0 0
      %313 = vmatpush2.bf16.msra.mxu0 0
      %314 = vmatprep.subr.bf16.mxu0 0
      %315 = vmatpush2.bf16.msra.mxu0 0
      %316 = vmatprep.subr.bf16.mxu0 0
      %317 = vmatpush2.bf16.msra.mxu0 0
      %318 = vmatprep.subr.bf16.mxu0 0
      %319 = vmatpush2.bf16.msra.mxu0 0
      %320 = vmatprep.subr.bf16.mxu0 0
      %321 = vmatpush2.bf16.msra.mxu0 0
      %322 = vmatprep.mubr.bf16.mxu0 0
      %323 = vmatmul.mubr.bf16.gmra.mxu0 %v288
      %v324 = vpop.f32.mrf.mxu0
      %v325 = vadd.f32 0.0, %v324
      %v326 = vpop.f32.mrf.mxu0
      %v327 = vpop.f32.mrf.mxu0
      %v328 = vadd.f32 0.0, %v327
      %v329 = vpop.f32.mrf.mxu0
      %330 = vdwg.mxu0
      %v339 = vunpack.c.l.b16 %v246
      %v340 = vunpack.c.l.b16 %v247
      %v341 = vunpack.c.l.b16 %v248
      %v342 = vunpack.c.l.b16 %v249
      %v343 = vunpack.c.l.b16 %v250
      %v344 = vunpack.c.l.b16 %v251
      %v345 = vunpack.c.l.b16 %v252
      %v346 = vunpack.c.l.b16 %v253
      %v347 = vpack.c.b16 %v340, %v339
      %v348 = vpack.c.b16 %v342, %v341
      %v349 = vpack.c.b16 %v344, %v343
      %v350 = vpack.c.b16 %v346, %v345
      %v356 = vsel %vm240, %v245, 0
      %358 = vmatprep.subr.bf16.mxu0 0
      %359 = vmatpush1.bf16.msra.mxu0 0
      %360 = vmatprep.subr.bf16.mxu0 0
      %361 = vmatpush1.bf16.msra.mxu0 0
      %362 = vmatprep.subr.bf16.mxu0 0
      %363 = vmatpush1.bf16.msra.mxu0 0
      %364 = vmatprep.subr.bf16.mxu0 0
      %365 = vmatpush1.bf16.msra.mxu0 0
      %366 = vmatprep.subr.bf16.mxu0 0
      %367 = vmatpush1.bf16.msra.mxu0 %v350
      %368 = vmatprep.subr.bf16.mxu0 0
      %369 = vmatpush1.bf16.msra.mxu0 %v349
      %370 = vmatprep.subr.bf16.mxu0 0
      %371 = vmatpush1.bf16.msra.mxu0 %v348
      %372 = vmatprep.subr.bf16.mxu0 0
      %373 = vmatpush1.bf16.msra.mxu0 %v347
      %374 = vmatprep.subr.bf16.mxu0 0
      %375 = vmatpush2.bf16.msra.mxu0 0
      %376 = vmatprep.subr.bf16.mxu0 0
      %377 = vmatpush2.bf16.msra.mxu0 0
      %378 = vmatprep.subr.bf16.mxu0 0
      %379 = vmatpush2.bf16.msra.mxu0 0
      %380 = vmatprep.subr.bf16.mxu0 0
      %381 = vmatpush2.bf16.msra.mxu0 0
      %382 = vmatprep.subr.bf16.mxu0 0
      %383 = vmatpush2.bf16.msra.mxu0 0
      %384 = vmatprep.subr.bf16.mxu0 0
      %385 = vmatpush2.bf16.msra.mxu0 0
      %386 = vmatprep.subr.bf16.mxu0 0
      %387 = vmatpush2.bf16.msra.mxu0 0
      %388 = vmatprep.subr.bf16.mxu0 0
      %389 = vmatpush2.bf16.msra.mxu0 0
      %390 = vmatprep.mubr.bf16.mxu0 0
      %391 = vmatmul.mubr.bf16.gmra.mxu0 %v356
      %v392 = vpop.f32.mrf.mxu0
      %v393 = vadd.f32 %v325, %v392
      %v394 = vpop.f32.mrf.mxu0
      %v395 = vpop.f32.mrf.mxu0
      %v396 = vadd.f32 %v328, %v395
      %v397 = vpop.f32.mrf.mxu0
      %398 = vdwg.mxu0
      %v399 = vld [vmem:[#allocation2 + $0x2] sm:$0xff]
      %v400 = vld [vmem:[#allocation2 + $0xa] sm:$0xff]
      %v401 = vpack.c.bf16 %v400, %v399
      %s402 = scalar_lea.vmem %s2, 64
      %v403 = vld [vmem:[%s402] sm:$0xf]
      %v404 = vld [vmem:[%s402 + $0x4] sm:$0xf]
      %v405 = vld [vmem:[%s402 + $0x8] sm:$0xf]
      %v406 = vld [vmem:[%s402 + $0xc] sm:$0xf]
      %v407 = vld [vmem:[%s402 + $0x10] sm:$0xf]
      %v408 = vld [vmem:[%s402 + $0x14] sm:$0xf]
      %v409 = vld [vmem:[%s402 + $0x18] sm:$0xf]
      %v410 = vld [vmem:[%s402 + $0x1c] sm:$0xf]
      %v419 = vunpack.c.l.b16 %v403
      %v420 = vunpack.c.l.b16 %v404
      %v421 = vunpack.c.l.b16 %v405
      %v422 = vunpack.c.l.b16 %v406
      %v423 = vunpack.c.l.b16 %v407
      %v424 = vunpack.c.l.b16 %v408
      %v425 = vunpack.c.l.b16 %v409
      %v426 = vunpack.c.l.b16 %v410
      %v427 = vpack.c.b16 %v420, %v419
      %v428 = vpack.c.b16 %v422, %v421
      %v429 = vpack.c.b16 %v424, %v423
      %v430 = vpack.c.b16 %v426, %v425
      %v436 = vsel %vm240, %v401, 0
      %438 = vmatprep.subr.bf16.mxu0 0
      %439 = vmatpush1.bf16.msra.mxu0 0
      %440 = vmatprep.subr.bf16.mxu0 0
      %441 = vmatpush1.bf16.msra.mxu0 0
      %442 = vmatprep.subr.bf16.mxu0 0
      %443 = vmatpush1.bf16.msra.mxu0 0
      %444 = vmatprep.subr.bf16.mxu0 0
      %445 = vmatpush1.bf16.msra.mxu0 0
      %446 = vmatprep.subr.bf16.mxu0 0
      %447 = vmatpush1.bf16.msra.mxu0 %v430
      %448 = vmatprep.subr.bf16.mxu0 0
      %449 = vmatpush1.bf16.msra.mxu0 %v429
      %450 = vmatprep.subr.bf16.mxu0 0
      %451 = vmatpush1.bf16.msra.mxu0 %v428
      %452 = vmatprep.subr.bf16.mxu0 0
      %453 = vmatpush1.bf16.msra.mxu0 %v427
      %454 = vmatprep.subr.bf16.mxu0 0
      %455 = vmatpush2.bf16.msra.mxu0 0
      %456 = vmatprep.subr.bf16.mxu0 0
      %457 = vmatpush2.bf16.msra.mxu0 0
      %458 = vmatprep.subr.bf16.mxu0 0
      %459 = vmatpush2.bf16.msra.mxu0 0
      %460 = vmatprep.subr.bf16.mxu0 0
      %461 = vmatpush2.bf16.msra.mxu0 0
      %462 = vmatprep.subr.bf16.mxu0 0
      %463 = vmatpush2.bf16.msra.mxu0 0
      %464 = vmatprep.subr.bf16.mxu0 0
      %465 = vmatpush2.bf16.msra.mxu0 0
      %466 = vmatprep.subr.bf16.mxu0 0
      %467 = vmatpush2.bf16.msra.mxu0 0
      %468 = vmatprep.subr.bf16.mxu0 0
      %469 = vmatpush2.bf16.msra.mxu0 0
      %470 = vmatprep.mubr.bf16.mxu0 0
      %471 = vmatmul.mubr.bf16.gmra.mxu0 %v436
      %v472 = vpop.f32.mrf.mxu0
      %v473 = vadd.f32 0.0, %v472
      %v474 = vpop.f32.mrf.mxu0
      %v475 = vpop.f32.mrf.mxu0
      %v476 = vadd.f32 0.0, %v475
      %v477 = vpop.f32.mrf.mxu0
      %478 = vdwg.mxu0
      %v479 = vadd.f32 %v393, %v473
      %v480 = vadd.f32 %v396, %v476
      %v481 = vld [vmem:[%s3] sm:$0x1]
      %v483 = vlaneseq
      %v484 = vshrl.u32 %v483, 7
      %v485 = vsub.s32 0, %v484
      %v486 = vrot.slane %v481, %v485
      %v488 = vadd.f32 %v479, %v486
      %v489 = vadd.f32 %v480, %v486
      %v490 = vmax.f32 %v488, 0.0
      %v491 = vmax.f32 %v489, 0.0
      %492 = vst [vmem:[#allocation3] sm:$0x1] 0.0
      %493 = vst [vmem:[#allocation3 + $0x11] sm:$0x1] 0.0
      %494 = vst [vmem:[#allocation3 + $0x1] sm:$0xff] %v490
      %495 = vst [vmem:[#allocation3 + $0x9] sm:$0xff] %v491
      %v496 = vld [vmem:[#allocation3] sm:$0xff]
      %v497 = vld [vmem:[#allocation3 + $0x8] sm:$0xff]
      %v498 = vpack.c.bf16 %v497, %v496
      %v499 = vld [vmem:[%s4] sm:$0xf]
      %v500 = vld [vmem:[%s4 + $0x4] sm:$0xf]
      %v501 = vld [vmem:[%s4 + $0x8] sm:$0xf]
      %v502 = vld [vmem:[%s4 + $0xc] sm:$0xf]
      %v503 = vld [vmem:[%s4 + $0x10] sm:$0xf]
      %v504 = vld [vmem:[%s4 + $0x14] sm:$0xf]
      %v505 = vld [vmem:[%s4 + $0x18] sm:$0xf]
      %v506 = vld [vmem:[%s4 + $0x1c] sm:$0xf]
      %v507 = vld [vmem:[%s4 + $0x20] sm:$0xf]
      %v508 = vld [vmem:[%s4 + $0x24] sm:$0xf]
      %v509 = vld [vmem:[%s4 + $0x28] sm:$0xf]
      %v510 = vld [vmem:[%s4 + $0x2c] sm:$0xf]
      %v511 = vld [vmem:[%s4 + $0x30] sm:$0xf]
      %v512 = vld [vmem:[%s4 + $0x34] sm:$0xf]
      %v513 = vld [vmem:[%s4 + $0x38] sm:$0xf]
      %v514 = vld [vmem:[%s4 + $0x3c] sm:$0xf]
      %v515 = vpack.c.bf16 %v491, %v490
      %s516 = scalar_lea.vmem %s4, 64
      %v517 = vld [vmem:[%s516] sm:$0xf]
      %v518 = vld [vmem:[%s516 + $0x4] sm:$0xf]
      %v519 = vld [vmem:[%s516 + $0x8] sm:$0xf]
      %v520 = vld [vmem:[%s516 + $0xc] sm:$0xf]
      %v521 = vld [vmem:[%s516 + $0x10] sm:$0xf]
      %v522 = vld [vmem:[%s516 + $0x14] sm:$0xf]
      %v523 = vld [vmem:[%s516 + $0x18] sm:$0xf]
      %v524 = vld [vmem:[%s516 + $0x1c] sm:$0xf]
      %v525 = vld [vmem:[%s516 + $0x20] sm:$0xf]
      %v526 = vld [vmem:[%s516 + $0x24] sm:$0xf]
      %v527 = vld [vmem:[%s516 + $0x28] sm:$0xf]
      %v528 = vld [vmem:[%s516 + $0x2c] sm:$0xf]
      %v529 = vld [vmem:[%s516 + $0x30] sm:$0xf]
      %v530 = vld [vmem:[%s516 + $0x34] sm:$0xf]
      %v531 = vld [vmem:[%s516 + $0x38] sm:$0xf]
      %v532 = vld [vmem:[%s516 + $0x3c] sm:$0xf]
      %v549 = vunpack.c.l.b16 %v517
      %v550 = vunpack.c.l.b16 %v518
      %v551 = vunpack.c.l.b16 %v519
      %v552 = vunpack.c.l.b16 %v520
      %v553 = vunpack.c.l.b16 %v521
      %v554 = vunpack.c.l.b16 %v522
      %v555 = vunpack.c.l.b16 %v523
      %v556 = vunpack.c.l.b16 %v524
      %v557 = vunpack.c.l.b16 %v525
      %v558 = vunpack.c.l.b16 %v526
      %v559 = vunpack.c.l.b16 %v527
      %v560 = vunpack.c.l.b16 %v528
      %v561 = vunpack.c.l.b16 %v529
      %v562 = vunpack.c.l.b16 %v530
      %v563 = vunpack.c.l.b16 %v531
      %v564 = vunpack.c.l.b16 %v532
      %v565 = vpack.c.b16 %v550, %v549
      %v566 = vpack.c.b16 %v552, %v551
      %v567 = vpack.c.b16 %v554, %v553
      %v568 = vpack.c.b16 %v556, %v555
      %v569 = vpack.c.b16 %v558, %v557
      %v570 = vpack.c.b16 %v560, %v559
      %v571 = vpack.c.b16 %v562, %v561
      %v572 = vpack.c.b16 %v564, %v563
      %581 = vmatprep.subr.bf16.mxu0 0
      %582 = vmatpush1.bf16.msra.mxu0 %v572
      %583 = vmatprep.subr.bf16.mxu0 0
      %584 = vmatpush1.bf16.msra.mxu0 %v571
      %585 = vmatprep.subr.bf16.mxu0 0
      %586 = vmatpush1.bf16.msra.mxu0 %v570
      %587 = vmatprep.subr.bf16.mxu0 0
      %588 = vmatpush1.bf16.msra.mxu0 %v569
      %589 = vmatprep.subr.bf16.mxu0 0
      %590 = vmatpush1.bf16.msra.mxu0 %v568
      %591 = vmatprep.subr.bf16.mxu0 0
      %592 = vmatpush1.bf16.msra.mxu0 %v567
      %593 = vmatprep.subr.bf16.mxu0 0
      %594 = vmatpush1.bf16.msra.mxu0 %v566
      %595 = vmatprep.subr.bf16.mxu0 0
      %596 = vmatpush1.bf16.msra.mxu0 %v565
      %597 = vmatprep.subr.bf16.mxu0 0
      %598 = vmatpush2.bf16.msra.mxu0 0
      %599 = vmatprep.subr.bf16.mxu0 0
      %600 = vmatpush2.bf16.msra.mxu0 0
      %601 = vmatprep.subr.bf16.mxu0 0
      %602 = vmatpush2.bf16.msra.mxu0 0
      %603 = vmatprep.subr.bf16.mxu0 0
      %604 = vmatpush2.bf16.msra.mxu0 0
      %605 = vmatprep.subr.bf16.mxu0 0
      %606 = vmatpush2.bf16.msra.mxu0 0
      %607 = vmatprep.subr.bf16.mxu0 0
      %608 = vmatpush2.bf16.msra.mxu0 0
      %609 = vmatprep.subr.bf16.mxu0 0
      %610 = vmatpush2.bf16.msra.mxu0 0
      %611 = vmatprep.subr.bf16.mxu0 0
      %612 = vmatpush2.bf16.msra.mxu0 0
      %613 = vmatprep.mubr.bf16.mxu0 0
      %614 = vmatmul.mubr.bf16.gmra.mxu0 %v515
      %v615 = vpop.f32.mrf.mxu0
      %v616 = vadd.f32 0.0, %v615
      %v617 = vpop.f32.mrf.mxu0
      %v618 = vpop.f32.mrf.mxu0
      %v619 = vadd.f32 0.0, %v618
      %v620 = vpop.f32.mrf.mxu0
      %621 = vdwg.mxu0
      %v638 = vunpack.c.l.b16 %v499
      %v639 = vunpack.c.l.b16 %v500
      %v640 = vunpack.c.l.b16 %v501
      %v641 = vunpack.c.l.b16 %v502
      %v642 = vunpack.c.l.b16 %v503
      %v643 = vunpack.c.l.b16 %v504
      %v644 = vunpack.c.l.b16 %v505
      %v645 = vunpack.c.l.b16 %v506
      %v646 = vunpack.c.l.b16 %v507
      %v647 = vunpack.c.l.b16 %v508
      %v648 = vunpack.c.l.b16 %v509
      %v649 = vunpack.c.l.b16 %v510
      %v650 = vunpack.c.l.b16 %v511
      %v651 = vunpack.c.l.b16 %v512
      %v652 = vunpack.c.l.b16 %v513
      %v653 = vunpack.c.l.b16 %v514
      %v654 = vpack.c.b16 %v639, %v638
      %v655 = vpack.c.b16 %v641, %v640
      %v656 = vpack.c.b16 %v643, %v642
      %v657 = vpack.c.b16 %v645, %v644
      %v658 = vpack.c.b16 %v647, %v646
      %v659 = vpack.c.b16 %v649, %v648
      %v660 = vpack.c.b16 %v651, %v650
      %v661 = vpack.c.b16 %v653, %v652
      %670 = vmatprep.subr.bf16.mxu0 0
      %671 = vmatpush1.bf16.msra.mxu0 %v661
      %672 = vmatprep.subr.bf16.mxu0 0
      %673 = vmatpush1.bf16.msra.mxu0 %v660
      %674 = vmatprep.subr.bf16.mxu0 0
      %675 = vmatpush1.bf16.msra.mxu0 %v659
      %676 = vmatprep.subr.bf16.mxu0 0
      %677 = vmatpush1.bf16.msra.mxu0 %v658
      %678 = vmatprep.subr.bf16.mxu0 0
      %679 = vmatpush1.bf16.msra.mxu0 %v657
      %680 = vmatprep.subr.bf16.mxu0 0
      %681 = vmatpush1.bf16.msra.mxu0 %v656
      %682 = vmatprep.subr.bf16.mxu0 0
      %683 = vmatpush1.bf16.msra.mxu0 %v655
      %684 = vmatprep.subr.bf16.mxu0 0
      %685 = vmatpush1.bf16.msra.mxu0 %v654
      %686 = vmatprep.subr.bf16.mxu0 0
      %687 = vmatpush2.bf16.msra.mxu0 0
      %688 = vmatprep.subr.bf16.mxu0 0
      %689 = vmatpush2.bf16.msra.mxu0 0
      %690 = vmatprep.subr.bf16.mxu0 0
      %691 = vmatpush2.bf16.msra.mxu0 0
      %692 = vmatprep.subr.bf16.mxu0 0
      %693 = vmatpush2.bf16.msra.mxu0 0
      %694 = vmatprep.subr.bf16.mxu0 0
      %695 = vmatpush2.bf16.msra.mxu0 0
      %696 = vmatprep.subr.bf16.mxu0 0
      %697 = vmatpush2.bf16.msra.mxu0 0
      %698 = vmatprep.subr.bf16.mxu0 0
      %699 = vmatpush2.bf16.msra.mxu0 0
      %700 = vmatprep.subr.bf16.mxu0 0
      %701 = vmatpush2.bf16.msra.mxu0 0
      %702 = vmatprep.mubr.bf16.mxu0 0
      %703 = vmatmul.mubr.bf16.gmra.mxu0 %v498
      %v704 = vpop.f32.mrf.mxu0
      %v705 = vadd.f32 %v616, %v704
      %v706 = vpop.f32.mrf.mxu0
      %v707 = vpop.f32.mrf.mxu0
      %v708 = vadd.f32 %v619, %v707
      %v709 = vpop.f32.mrf.mxu0
      %710 = vdwg.mxu0
      %v711 = vld [vmem:[#allocation3 + $0x2] sm:$0xff]
      %v712 = vld [vmem:[#allocation3 + $0xa] sm:$0xff]
      %v713 = vpack.c.bf16 %v712, %v711
      %s714 = scalar_lea.vmem %s4, 128
      %v715 = vld [vmem:[%s714] sm:$0xf]
      %v716 = vld [vmem:[%s714 + $0x4] sm:$0xf]
      %v717 = vld [vmem:[%s714 + $0x8] sm:$0xf]
      %v718 = vld [vmem:[%s714 + $0xc] sm:$0xf]
      %v719 = vld [vmem:[%s714 + $0x10] sm:$0xf]
      %v720 = vld [vmem:[%s714 + $0x14] sm:$0xf]
      %v721 = vld [vmem:[%s714 + $0x18] sm:$0xf]
      %v722 = vld [vmem:[%s714 + $0x1c] sm:$0xf]
      %v723 = vld [vmem:[%s714 + $0x20] sm:$0xf]
      %v724 = vld [vmem:[%s714 + $0x24] sm:$0xf]
      %v725 = vld [vmem:[%s714 + $0x28] sm:$0xf]
      %v726 = vld [vmem:[%s714 + $0x2c] sm:$0xf]
      %v727 = vld [vmem:[%s714 + $0x30] sm:$0xf]
      %v728 = vld [vmem:[%s714 + $0x34] sm:$0xf]
      %v729 = vld [vmem:[%s714 + $0x38] sm:$0xf]
      %v730 = vld [vmem:[%s714 + $0x3c] sm:$0xf]
      %v747 = vunpack.c.l.b16 %v715
      %v748 = vunpack.c.l.b16 %v716
      %v749 = vunpack.c.l.b16 %v717
      %v750 = vunpack.c.l.b16 %v718
      %v751 = vunpack.c.l.b16 %v719
      %v752 = vunpack.c.l.b16 %v720
      %v753 = vunpack.c.l.b16 %v721
      %v754 = vunpack.c.l.b16 %v722
      %v755 = vunpack.c.l.b16 %v723
      %v756 = vunpack.c.l.b16 %v724
      %v757 = vunpack.c.l.b16 %v725
      %v758 = vunpack.c.l.b16 %v726
      %v759 = vunpack.c.l.b16 %v727
      %v760 = vunpack.c.l.b16 %v728
      %v761 = vunpack.c.l.b16 %v729
      %v762 = vunpack.c.l.b16 %v730
      %v763 = vpack.c.b16 %v748, %v747
      %v764 = vpack.c.b16 %v750, %v749
      %v765 = vpack.c.b16 %v752, %v751
      %v766 = vpack.c.b16 %v754, %v753
      %v767 = vpack.c.b16 %v756, %v755
      %v768 = vpack.c.b16 %v758, %v757
      %v769 = vpack.c.b16 %v760, %v759
      %v770 = vpack.c.b16 %v762, %v761
      %779 = vmatprep.subr.bf16.mxu0 0
      %780 = vmatpush1.bf16.msra.mxu0 %v770
      %781 = vmatprep.subr.bf16.mxu0 0
      %782 = vmatpush1.bf16.msra.mxu0 %v769
      %783 = vmatprep.subr.bf16.mxu0 0
      %784 = vmatpush1.bf16.msra.mxu0 %v768
      %785 = vmatprep.subr.bf16.mxu0 0
      %786 = vmatpush1.bf16.msra.mxu0 %v767
      %787 = vmatprep.subr.bf16.mxu0 0
      %788 = vmatpush1.bf16.msra.mxu0 %v766
      %789 = vmatprep.subr.bf16.mxu0 0
      %790 = vmatpush1.bf16.msra.mxu0 %v765
      %791 = vmatprep.subr.bf16.mxu0 0
      %792 = vmatpush1.bf16.msra.mxu0 %v764
      %793 = vmatprep.subr.bf16.mxu0 0
      %794 = vmatpush1.bf16.msra.mxu0 %v763
      %795 = vmatprep.subr.bf16.mxu0 0
      %796 = vmatpush2.bf16.msra.mxu0 0
      %797 = vmatprep.subr.bf16.mxu0 0
      %798 = vmatpush2.bf16.msra.mxu0 0
      %799 = vmatprep.subr.bf16.mxu0 0
      %800 = vmatpush2.bf16.msra.mxu0 0
      %801 = vmatprep.subr.bf16.mxu0 0
      %802 = vmatpush2.bf16.msra.mxu0 0
      %803 = vmatprep.subr.bf16.mxu0 0
      %804 = vmatpush2.bf16.msra.mxu0 0
      %805 = vmatprep.subr.bf16.mxu0 0
      %806 = vmatpush2.bf16.msra.mxu0 0
      %807 = vmatprep.subr.bf16.mxu0 0
      %808 = vmatpush2.bf16.msra.mxu0 0
      %809 = vmatprep.subr.bf16.mxu0 0
      %810 = vmatpush2.bf16.msra.mxu0 0
      %811 = vmatprep.mubr.bf16.mxu0 0
      %812 = vmatmul.mubr.bf16.gmra.mxu0 %v713
      %v813 = vpop.f32.mrf.mxu0
      %v814 = vadd.f32 0.0, %v813
      %v815 = vpop.f32.mrf.mxu0
      %v816 = vpop.f32.mrf.mxu0
      %v817 = vadd.f32 0.0, %v816
      %v818 = vpop.f32.mrf.mxu0
      %819 = vdwg.mxu0
      %v820 = vadd.f32 %v705, %v814
      %v821 = vadd.f32 %v708, %v817
      %v830 = vunpack.c.l.b16 %v229
      %v831 = vunpack.c.l.b16 %v230
      %v832 = vunpack.c.l.b16 %v231
      %v833 = vunpack.c.l.b16 %v232
      %v834 = vunpack.c.l.b16 %v233
      %v835 = vunpack.c.l.b16 %v234
      %v836 = vunpack.c.l.b16 %v235
      %v837 = vunpack.c.l.b16 %v236
      %v838 = vpack.c.b16 %v831, %v830
      %v839 = vpack.c.b16 %v833, %v832
      %v840 = vpack.c.b16 %v835, %v834
      %v841 = vpack.c.b16 %v837, %v836
      %846 = vmatprep.subr.bf16.mxu0 0
      %847 = vmatpush1.bf16.msra.mxu0 0
      %848 = vmatprep.subr.bf16.mxu0 0
      %849 = vmatpush1.bf16.msra.mxu0 0
      %850 = vmatprep.subr.bf16.mxu0 0
      %851 = vmatpush1.bf16.msra.mxu0 0
      %852 = vmatprep.subr.bf16.mxu0 0
      %853 = vmatpush1.bf16.msra.mxu0 0
      %854 = vmatprep.subr.bf16.mxu0 0
      %855 = vmatpush1.bf16.msra.mxu0 %v841
      %856 = vmatprep.subr.bf16.mxu0 0
      %857 = vmatpush1.bf16.msra.mxu0 %v840
      %858 = vmatprep.subr.bf16.mxu0 0
      %859 = vmatpush1.bf16.msra.mxu0 %v839
      %860 = vmatprep.subr.bf16.mxu0 0
      %861 = vmatpush1.bf16.msra.mxu0 %v838
      %862 = vmatprep.subr.bf16.mxu0 0
      %863 = vmatpush2.bf16.msra.mxu0 0
      %864 = vmatprep.subr.bf16.mxu0 0
      %865 = vmatpush2.bf16.msra.mxu0 0
      %866 = vmatprep.subr.bf16.mxu0 0
      %867 = vmatpush2.bf16.msra.mxu0 0
      %868 = vmatprep.subr.bf16.mxu0 0
      %869 = vmatpush2.bf16.msra.mxu0 0
      %870 = vmatprep.subr.bf16.mxu0 0
      %871 = vmatpush2.bf16.msra.mxu0 0
      %872 = vmatprep.subr.bf16.mxu0 0
      %873 = vmatpush2.bf16.msra.mxu0 0
      %874 = vmatprep.subr.bf16.mxu0 0
      %875 = vmatpush2.bf16.msra.mxu0 0
      %876 = vmatprep.subr.bf16.mxu0 0
      %877 = vmatpush2.bf16.msra.mxu0 0
      %878 = vmatprep.mubr.bf16.mxu0 0
      %879 = vmatmul.mubr.bf16.gmra.mxu0 %v288
      %v880 = vpop.f32.mrf.mxu0
      %v881 = vadd.f32 %v820, %v880
      %v882 = vpop.f32.mrf.mxu0
      %v883 = vpop.f32.mrf.mxu0
      %v884 = vadd.f32 %v821, %v883
      %v885 = vpop.f32.mrf.mxu0
      %886 = vdwg.mxu0
      %v887 = vmax.f32 %v881, 0.0
      %v888 = vmax.f32 %v884, 0.0
      %889 = vst [vmem:[%s224] sm:$0xff] %v887
      %890 = vst [vmem:[%s224 + $0x8] sm:$0xff] %v888
      %p891 = scmp.lt.s32.totalorder %s16, 1
      %s892 = scalar_select %p891, %s16, 1
      %s893 = smul.addr %s892, 2
      %s894 = smul.addr %s893, 8
      %s895 = scalar_lea.vmem %s5, %s894
      // Predicated region
      $region41: #{refinement_block_forward.1} parent=39 // pred_check
        %p896 = pneg %p144
      $region42: #{refinement_block_forward.1} parent=39 // pred_check_branch
        %898 = sbr.rel (%p896) target = $region44
      $region43: #{refinement_block_forward.1} parent=39 // pred_region
        _
      $region44: #{refinement_block_forward.1} parent=39 // pred_fallthru
        _
    $region40: #{refinement_block_forward.1} parent=5 // pred_fallthru
      _
    %p899 = scmp.le.s32.totalorder 2, %s11
    // Predicated region
    $region45: #{refinement_block_forward.1} parent=5 // pred_check
      %p900 = pneg %p899
    $region46: #{refinement_block_forward.1} parent=5 // pred_check_branch
      %902 = sbr.rel (%p900) target = $region48
    $region47: #{refinement_block_forward.1} parent=5 // pred_region
      %s903 = ssub.s32 %s11, 2
      // Predicated region
      $region49: #{refinement_block_forward.1} parent=47 // pred_check
        %p904 = pneg %p150
      $region50: #{refinement_block_forward.1} parent=47 // pred_check_branch
        %906 = sbr.rel (%p904) target = $region52
      $region51: #{refinement_block_forward.1} parent=47 // pred_region
        %p907 = scmp.lt.s32.totalorder %s17, 1
        %s908 = scalar_select %p907, %s17, 1
        %s909 = smul.addr %s908, 2
        %s910 = smul.addr %s909, 8
        %s911 = scalar_lea.vmem %s5, %s910
      $region52: #{refinement_block_forward.1} parent=47 // pred_fallthru
        _
    $region48: #{refinement_block_forward.1} parent=5 // pred_fallthru
      _
  $region6: #{refinement_block_forward.1} parent=0 // loop_footer
    %s15 = sadd.s32 1, %s11
  $region7: #{refinement_block_forward.1} parent=0 // loop_footer_branch
    %10 = sbr.rel target = $region3
  $region8: #{refinement_block_forward.1} parent=0 // loop_exit
    _

</llo_original>
